<compile_context>
chip_gen: v6e
topology: v6e:2x2x1
jax: 0.10.0
libtpu: 0.0.40
codegen_flags: <defaults>
</compile_context>

<pallas_src>
import jax
import jax.numpy as jnp
from jax.experimental import pallas as pl
from jax.experimental.pallas import tpu as pltpu


_SQRT_HALF = 0.7071067811865476


def _erf_f32(x):
    # Abramowitz & Stegun 7.1.26 polynomial erf, |err| <= 1.5e-7 (~f32 eps).
    # Reciprocal + exp both go to the EUP slot; the polynomial is a short
    # VALU chain.
    ax = jnp.abs(x)
    t = pl.reciprocal(1.0 + 0.3275911 * ax, approx=True)
    poly = t * (0.254829592 + t * (-0.284496736 + t * (1.421413741
           + t * (-1.453152027 + t * 1.061405429))))
    y = 1.0 - poly * jnp.exp(-ax * ax)
    return jnp.where(x < 0.0, -y, y)


def _gelu_exact(x):
    # PyTorch F.gelu default (approximate='none'): 0.5 * x * (1 + erf(x/sqrt(2)))
    return 0.5 * x * (1.0 + _erf_f32(x * _SQRT_HALF))


def _make_mlp_kernel(num_layers, compute_dtype):
    def kernel(x_ref, *rest):
        # rest = (w0, b0, w1, b1, ..., w_{L-1}, b_{L-1}, o_ref)
        o_ref = rest[-1]
        params = rest[:-1]
        h = x_ref[...]                                    # (tm, d_in), compute_dtype
        out_f32 = None
        for i in range(num_layers):
            w = params[2 * i][...]                        # (d_i, d_{i+1}), compute_dtype
            b = params[2 * i + 1][...]                    # (1, d_{i+1}),   float32
            acc = jnp.dot(h, w, preferred_element_type=jnp.float32) + b
            if i < num_layers - 1:
                h = _gelu_exact(acc).astype(compute_dtype)
            else:
                out_f32 = acc
        o_ref[...] = out_f32.astype(o_ref.dtype)
    return kernel


def _round_up(v, k):
    return ((v + k - 1) // k) * k


def mlp_forward(x, weights, biases, *, row_tile=512, compute_dtype=jnp.bfloat16,
                vmem_budget_bytes=48 * 1024 * 1024):
    """Fused MLP forward.

    x:       (..., d_in)
    weights: list of (d_i, d_{i+1}) arrays (pre-transposed so the kernel does x @ W)
    biases:  list of (d_{i+1},) arrays
    Fast path: compute_dtype=bfloat16 (MXU-native on v5e/v6e/v7x), f32 accumulation.
    Pass compute_dtype=jnp.float32 to match the PyTorch module bit-for-bit-ish.
    """
    num_layers = len(weights)
    assert num_layers >= 1 and len(biases) == num_layers

    lead_shape = x.shape[:-1]
    d_in = int(x.shape[-1])
    d_out = int(weights[-1].shape[1])
    out_dtype = x.dtype

    m = 1
    for s in lead_shape:
        m *= int(s)

    cbytes = jnp.dtype(compute_dtype).itemsize
    obytes = jnp.dtype(out_dtype).itemsize
    w_bytes = sum(int(w.size) for w in weights) * cbytes
    b_bytes = sum(int(b.size) for b in biases) * 4
    widths = sorted((int(w.shape[1]) for w in weights), reverse=True)
    act_width = widths[0] + (widths[1] if len(widths) > 1 else 0)

    def vmem_bytes(tm):
        # 2x-buffered x/out tiles, single-buffered resident weights/biases,
        # and the two widest live f32 intermediates.
        return (2 * tm * d_in * cbytes + 2 * tm * d_out * obytes
                + w_bytes + b_bytes + 4 * tm * act_width)

    mult = 16 if cbytes < 4 else 8            # sublane packing for sub-32-bit dtypes
    tm = max(mult, min(_round_up(row_tile, mult), _round_up(m, mult)))
    # v7x: ensure the "parallel" row axis has >= 2 steps so both TensorCores
    # get work even at small/medium M (no-op cost on v5e/v6e).
    if pl.cdiv(m, tm) < 2 and m > mult:
        tm = _round_up(pl.cdiv(m, 2), mult)
    # Shrink the row tile until it fits a conservative cross-generation budget
    # (v7x has only 64 MiB physical VMEM).
    while vmem_bytes(tm) > vmem_budget_bytes and tm > mult:
        tm = max(mult, _round_up(tm // 2, mult))
    if vmem_bytes(tm) > vmem_budget_bytes:
        # TODO(synk): add an N/K-tiled + VMEM-accumulator fallback for
        # transformer-scale widths whose weights alone exceed VMEM.
        raise ValueError("MLP weights + activations exceed the VMEM budget; "
                         "an N/K-tiled fallback is required for these widths.")

    grid = (pl.cdiv(m, tm),)

    # Pre-cast HBM-side: halves weight/x DMA bytes on the bf16 path and removes
    # repeated in-kernel casts. Biases stay f32 (tiny; preserves numerics).
    x2 = x.reshape(m, d_in).astype(compute_dtype)
    args = [x2]
    in_specs = [pl.BlockSpec((tm, d_in), lambda i: (i, 0))]

    flops = 0
    transcendentals = 0
    bytes_accessed = m * d_in * cbytes + m * d_out * obytes + w_bytes + b_bytes
    for li, (w, b) in enumerate(zip(weights, biases)):
        di, do = int(w.shape[0]), int(w.shape[1])
        args += [w.astype(compute_dtype), b.reshape(1, do).astype(jnp.float32)]
        # Constant index_map -> weights are resident; single-buffer them.
        in_specs += [
            pl.BlockSpec((di, do), lambda i: (0, 0), pipeline_mode=pl.Buffered(1)),
            pl.BlockSpec((1, do), lambda i: (0, 0), pipeline_mode=pl.Buffered(1)),
        ]
        flops += 2 * m * di * do + m * do
        if li < num_layers - 1:
            transcendentals += 2 * m * do     # exp + reciprocal per GELU element

    est = vmem_bytes(tm)
    vmem_limit = int(min(56 * 1024 * 1024, max(2 * est, 16 * 1024 * 1024)))

    out = pl.pallas_call(
        _make_mlp_kernel(num_layers, compute_dtype),
        out_shape=jax.ShapeDtypeStruct((m, d_out), out_dtype),
        grid=grid,
        in_specs=in_specs,
        out_specs=pl.BlockSpec((tm, d_out), lambda i: (i, 0)),
        compiler_params=pltpu.CompilerParams(
            dimension_semantics=("parallel",),
            vmem_limit_bytes=vmem_limit),
        cost_estimate=pl.CostEstimate(flops=int(flops),
                                      transcendentals=int(transcendentals),
                                      bytes_accessed=int(bytes_accessed)),
    )(*args)
    return out.reshape(*lead_shape, d_out)


if __name__ == "__main__":
    # Shapes implied by the module: x (..., input_dim); MLP(input_dim, hidden, out, L)
    B, S = 2, 16
    input_dim, hidden_dim, output_dim, num_layers = 32, 128, 128, 3

    key = jax.random.PRNGKey(0)
    k_x, k_p = jax.random.split(key)
    x = jax.random.normal(k_x, (B, S, input_dim), jnp.float32)

    dims = [input_dim] + [hidden_dim] * (num_layers - 1) + [output_dim]
    weights, biases = [], []
    pkeys = jax.random.split(k_p, 2 * num_layers)
    for i in range(num_layers):
        fan_in, fan_out = dims[i], dims[i + 1]
        bound = 1.0 / (fan_in ** 0.5)         # nn.Linear default init bounds
        # Stored pre-transposed (fan_in, fan_out) so the kernel computes x @ W.
        w = jax.random.uniform(pkeys[2 * i], (fan_in, fan_out), jnp.float32, -bound, bound)
        b = jax.random.uniform(pkeys[2 * i + 1], (fan_out,), jnp.float32, -bound, bound)
        weights.append(w)
        biases.append(b)

    out = mlp_forward(x, weights, biases)     # default bf16 MXU fast path
    out = jax.block_until_ready(out)

    # Pure-JAX f32 reference: Linear -> exact GELU (F.gelu default) -> ... -> Linear
    h = x
    for i, (w, b) in enumerate(zip(weights, biases)):
        h = jnp.einsum("bsd,do->bso", h, w) + b
        if i < num_layers - 1:
            h = jax.nn.gelu(h, approximate=False)
    ref = h

    assert out.shape == (B, S, output_dim)
    out_f32 = out.astype(jnp.float32)
    err = float(jnp.max(jnp.abs(out_f32 - ref)))
    # bf16 compute path vs f32 reference: loose tolerance.
    assert jnp.allclose(out_f32, ref, atol=5e-2, rtol=5e-2), err
    print("KERNEL_OK")
</pallas_src>

<mosaic_0001>
module attributes {stable_mosaic.version = 11 : i64} {
  func.func @kernel(%arg0: i32, %arg1: memref<16x32xbf16, #tpu.memory_space<vmem>>, %arg2: memref<32x128xbf16, #tpu.memory_space<vmem>>, %arg3: memref<1x128xf32, #tpu.memory_space<vmem>>, %arg4: memref<128x128xbf16, #tpu.memory_space<vmem>>, %arg5: memref<1x128xf32, #tpu.memory_space<vmem>>, %arg6: memref<128x128xbf16, #tpu.memory_space<vmem>>, %arg7: memref<1x128xf32, #tpu.memory_space<vmem>>, %arg8: memref<16x128xf32, #tpu.memory_space<vmem>>) attributes {dimension_semantics = [#tpu.dimension_semantics<parallel>], iteration_bounds = array<i64: 2>, scalar_prefetch = 0 : i64, scratch_operands = 0 : i64, tpu.core_type = #tpu.core_type<tc>, window_params = [{transform_indices = @transform_0, window_bounds = array<i64: 16, 32>}, {pipeline_mode = #tpu.pipeline_mode<synchronous>, transform_indices = @transform_1, window_bounds = array<i64: 32, 128>}, {pipeline_mode = #tpu.pipeline_mode<synchronous>, transform_indices = @transform_2, window_bounds = array<i64: 1, 128>}, {pipeline_mode = #tpu.pipeline_mode<synchronous>, transform_indices = @transform_3, window_bounds = array<i64: 128, 128>}, {pipeline_mode = #tpu.pipeline_mode<synchronous>, transform_indices = @transform_4, window_bounds = array<i64: 1, 128>}, {pipeline_mode = #tpu.pipeline_mode<synchronous>, transform_indices = @transform_5, window_bounds = array<i64: 128, 128>}, {pipeline_mode = #tpu.pipeline_mode<synchronous>, transform_indices = @transform_6, window_bounds = array<i64: 1, 128>}, {transform_indices = @transform_7, window_bounds = array<i64: 16, 128>}]} {
    %c0 = arith.constant 0 : index
    %c0_0 = arith.constant 0 : index
    %0 = vector.load %arg1[%c0, %c0_0] : memref<16x32xbf16, #tpu.memory_space<vmem>>, vector<16x32xbf16>
    %c0_1 = arith.constant 0 : index
    %c0_2 = arith.constant 0 : index
    %1 = vector.load %arg2[%c0_1, %c0_2] : memref<32x128xbf16, #tpu.memory_space<vmem>>, vector<32x128xbf16>
    %c0_3 = arith.constant 0 : index
    %c0_4 = arith.constant 0 : index
    %2 = vector.load %arg3[%c0_3, %c0_4] : memref<1x128xf32, #tpu.memory_space<vmem>>, vector<1x128xf32>
    %cst = arith.constant dense<0.000000e+00> : vector<16x128xf32>
    %3 = tpu.matmul %0, %1, %cst {dimension_numbers = #tpu.dot_dimension_numbers<[1], [0], [0], [1], [0, 0, 1, 1], [], []>} : vector<16x32xbf16>, vector<32x128xbf16>, vector<16x128xf32> -> vector<16x128xf32>
    %4 = vector.broadcast %2 : vector<1x128xf32> to vector<16x128xf32>
    %5 = arith.addf %3, %4 : vector<16x128xf32>
    %cst_5 = arith.constant 5.000000e-01 : f32
    %6 = vector.broadcast %cst_5 : f32 to vector<16x128xf32>
    %7 = arith.mulf %6, %5 : vector<16x128xf32>
    %cst_6 = arith.constant 0.707106769 : f32
    %8 = vector.broadcast %cst_6 : f32 to vector<16x128xf32>
    %9 = arith.mulf %5, %8 : vector<16x128xf32>
    %10 = math.absf %9 : vector<16x128xf32>
    %cst_7 = arith.constant 0.327591091 : f32
    %11 = vector.broadcast %cst_7 : f32 to vector<16x128xf32>
    %12 = arith.mulf %11, %10 : vector<16x128xf32>
    %cst_8 = arith.constant 1.000000e+00 : f32
    %13 = vector.broadcast %cst_8 : f32 to vector<16x128xf32>
    %14 = arith.addf %13, %12 : vector<16x128xf32>
    %15 = tpu.reciprocal %14 {approx = true} : vector<16x128xf32> -> vector<16x128xf32>
    %cst_9 = arith.constant 1.06140542 : f32
    %16 = vector.broadcast %cst_9 : f32 to vector<16x128xf32>
    %17 = arith.mulf %15, %16 : vector<16x128xf32>
    %cst_10 = arith.constant -1.45315206 : f32
    %18 = vector.broadcast %cst_10 : f32 to vector<16x128xf32>
    %19 = arith.addf %18, %17 : vector<16x128xf32>
    %20 = arith.mulf %15, %19 : vector<16x128xf32>
    %cst_11 = arith.constant 1.42141378 : f32
    %21 = vector.broadcast %cst_11 : f32 to vector<16x128xf32>
    %22 = arith.addf %21, %20 : vector<16x128xf32>
    %23 = arith.mulf %15, %22 : vector<16x128xf32>
    %cst_12 = arith.constant -0.284496725 : f32
    %24 = vector.broadcast %cst_12 : f32 to vector<16x128xf32>
    %25 = arith.addf %24, %23 : vector<16x128xf32>
    %26 = arith.mulf %15, %25 : vector<16x128xf32>
    %cst_13 = arith.constant 0.254829586 : f32
    %27 = vector.broadcast %cst_13 : f32 to vector<16x128xf32>
    %28 = arith.addf %27, %26 : vector<16x128xf32>
    %29 = arith.mulf %15, %28 : vector<16x128xf32>
    %cst_14 = arith.constant 0.000000e+00 : f32
    %30 = vector.broadcast %cst_14 : f32 to vector<16x128xf32>
    %31 = arith.subf %30, %10 : vector<16x128xf32>
    %32 = arith.mulf %31, %10 : vector<16x128xf32>
    %33 = math.exp %32 : vector<16x128xf32>
    %34 = arith.mulf %29, %33 : vector<16x128xf32>
    %cst_15 = arith.constant 1.000000e+00 : f32
    %35 = vector.broadcast %cst_15 : f32 to vector<16x128xf32>
    %36 = arith.subf %35, %34 : vector<16x128xf32>
    %cst_16 = arith.constant 0.000000e+00 : f32
    %37 = vector.broadcast %cst_16 : f32 to vector<16x128xf32>
    %38 = arith.cmpf olt, %9, %37 : vector<16x128xf32>
    %cst_17 = arith.constant 0.000000e+00 : f32
    %39 = vector.broadcast %cst_17 : f32 to vector<16x128xf32>
    %40 = arith.subf %39, %36 : vector<16x128xf32>
    %41 = arith.select %38, %40, %36 : vector<16x128xi1>, vector<16x128xf32>
    %cst_18 = arith.constant 1.000000e+00 : f32
    %42 = vector.broadcast %cst_18 : f32 to vector<16x128xf32>
    %43 = arith.addf %42, %41 : vector<16x128xf32>
    %44 = arith.mulf %7, %43 : vector<16x128xf32>
    %45 = arith.truncf %44 : vector<16x128xf32> to vector<16x128xbf16>
    %c0_19 = arith.constant 0 : index
    %c0_20 = arith.constant 0 : index
    %46 = vector.load %arg4[%c0_19, %c0_20] : memref<128x128xbf16, #tpu.memory_space<vmem>>, vector<128x128xbf16>
    %c0_21 = arith.constant 0 : index
    %c0_22 = arith.constant 0 : index
    %47 = vector.load %arg5[%c0_21, %c0_22] : memref<1x128xf32, #tpu.memory_space<vmem>>, vector<1x128xf32>
    %cst_23 = arith.constant dense<0.000000e+00> : vector<16x128xf32>
    %48 = tpu.matmul %45, %46, %cst_23 {dimension_numbers = #tpu.dot_dimension_numbers<[1], [0], [0], [1], [0, 0, 1, 1], [], []>} : vector<16x128xbf16>, vector<128x128xbf16>, vector<16x128xf32> -> vector<16x128xf32>
    %49 = vector.broadcast %47 : vector<1x128xf32> to vector<16x128xf32>
    %50 = arith.addf %48, %49 : vector<16x128xf32>
    %cst_24 = arith.constant 5.000000e-01 : f32
    %51 = vector.broadcast %cst_24 : f32 to vector<16x128xf32>
    %52 = arith.mulf %51, %50 : vector<16x128xf32>
    %cst_25 = arith.constant 0.707106769 : f32
    %53 = vector.broadcast %cst_25 : f32 to vector<16x128xf32>
    %54 = arith.mulf %50, %53 : vector<16x128xf32>
    %55 = math.absf %54 : vector<16x128xf32>
    %cst_26 = arith.constant 0.327591091 : f32
    %56 = vector.broadcast %cst_26 : f32 to vector<16x128xf32>
    %57 = arith.mulf %56, %55 : vector<16x128xf32>
    %cst_27 = arith.constant 1.000000e+00 : f32
    %58 = vector.broadcast %cst_27 : f32 to vector<16x128xf32>
    %59 = arith.addf %58, %57 : vector<16x128xf32>
    %60 = tpu.reciprocal %59 {approx = true} : vector<16x128xf32> -> vector<16x128xf32>
    %cst_28 = arith.constant 1.06140542 : f32
    %61 = vector.broadcast %cst_28 : f32 to vector<16x128xf32>
    %62 = arith.mulf %60, %61 : vector<16x128xf32>
    %cst_29 = arith.constant -1.45315206 : f32
    %63 = vector.broadcast %cst_29 : f32 to vector<16x128xf32>
    %64 = arith.addf %63, %62 : vector<16x128xf32>
    %65 = arith.mulf %60, %64 : vector<16x128xf32>
    %cst_30 = arith.constant 1.42141378 : f32
    %66 = vector.broadcast %cst_30 : f32 to vector<16x128xf32>
    %67 = arith.addf %66, %65 : vector<16x128xf32>
    %68 = arith.mulf %60, %67 : vector<16x128xf32>
    %cst_31 = arith.constant -0.284496725 : f32
    %69 = vector.broadcast %cst_31 : f32 to vector<16x128xf32>
    %70 = arith.addf %69, %68 : vector<16x128xf32>
    %71 = arith.mulf %60, %70 : vector<16x128xf32>
    %cst_32 = arith.constant 0.254829586 : f32
    %72 = vector.broadcast %cst_32 : f32 to vector<16x128xf32>
    %73 = arith.addf %72, %71 : vector<16x128xf32>
    %74 = arith.mulf %60, %73 : vector<16x128xf32>
    %cst_33 = arith.constant 0.000000e+00 : f32
    %75 = vector.broadcast %cst_33 : f32 to vector<16x128xf32>
    %76 = arith.subf %75, %55 : vector<16x128xf32>
    %77 = arith.mulf %76, %55 : vector<16x128xf32>
    %78 = math.exp %77 : vector<16x128xf32>
    %79 = arith.mulf %74, %78 : vector<16x128xf32>
    %cst_34 = arith.constant 1.000000e+00 : f32
    %80 = vector.broadcast %cst_34 : f32 to vector<16x128xf32>
    %81 = arith.subf %80, %79 : vector<16x128xf32>
    %cst_35 = arith.constant 0.000000e+00 : f32
    %82 = vector.broadcast %cst_35 : f32 to vector<16x128xf32>
    %83 = arith.cmpf olt, %54, %82 : vector<16x128xf32>
    %cst_36 = arith.constant 0.000000e+00 : f32
    %84 = vector.broadcast %cst_36 : f32 to vector<16x128xf32>
    %85 = arith.subf %84, %81 : vector<16x128xf32>
    %86 = arith.select %83, %85, %81 : vector<16x128xi1>, vector<16x128xf32>
    %cst_37 = arith.constant 1.000000e+00 : f32
    %87 = vector.broadcast %cst_37 : f32 to vector<16x128xf32>
    %88 = arith.addf %87, %86 : vector<16x128xf32>
    %89 = arith.mulf %52, %88 : vector<16x128xf32>
    %90 = arith.truncf %89 : vector<16x128xf32> to vector<16x128xbf16>
    %c0_38 = arith.constant 0 : index
    %c0_39 = arith.constant 0 : index
    %91 = vector.load %arg6[%c0_38, %c0_39] : memref<128x128xbf16, #tpu.memory_space<vmem>>, vector<128x128xbf16>
    %c0_40 = arith.constant 0 : index
    %c0_41 = arith.constant 0 : index
    %92 = vector.load %arg7[%c0_40, %c0_41] : memref<1x128xf32, #tpu.memory_space<vmem>>, vector<1x128xf32>
    %cst_42 = arith.constant dense<0.000000e+00> : vector<16x128xf32>
    %93 = tpu.matmul %90, %91, %cst_42 {dimension_numbers = #tpu.dot_dimension_numbers<[1], [0], [0], [1], [0, 0, 1, 1], [], []>} : vector<16x128xbf16>, vector<128x128xbf16>, vector<16x128xf32> -> vector<16x128xf32>
    %94 = vector.broadcast %92 : vector<1x128xf32> to vector<16x128xf32>
    %95 = arith.addf %93, %94 : vector<16x128xf32>
    %c0_43 = arith.constant 0 : index
    %c0_44 = arith.constant 0 : index
    %96 = vector.load %arg8[%c0_43, %c0_44] : memref<16x128xf32, #tpu.memory_space<vmem>>, vector<16x128xf32>
    tpu.vector_store %arg8[%c0_43, %c0_44], %95 {strides = array<i32>} : memref<16x128xf32, #tpu.memory_space<vmem>>, vector<16x128xf32>,
    return
  }
  func.func @transform_0(%arg0: i32) -> (i32, i32) {
    %c0_i32 = arith.constant 0 : i32
    %c0_i32_0 = arith.constant 0 : i32
    return %arg0, %c0_i32 : i32, i32
  }
  func.func @transform_1(%arg0: i32) -> (i32, i32) {
    %c0_i32 = arith.constant 0 : i32
    %c0_i32_0 = arith.constant 0 : i32
    %c0_i32_1 = arith.constant 0 : i32
    return %c0_i32, %c0_i32_0 : i32, i32
  }
  func.func @transform_2(%arg0: i32) -> (i32, i32) {
    %c0_i32 = arith.constant 0 : i32
    %c0_i32_0 = arith.constant 0 : i32
    %c0_i32_1 = arith.constant 0 : i32
    return %c0_i32, %c0_i32_0 : i32, i32
  }
  func.func @transform_3(%arg0: i32) -> (i32, i32) {
    %c0_i32 = arith.constant 0 : i32
    %c0_i32_0 = arith.constant 0 : i32
    %c0_i32_1 = arith.constant 0 : i32
    return %c0_i32, %c0_i32_0 : i32, i32
  }
  func.func @transform_4(%arg0: i32) -> (i32, i32) {
    %c0_i32 = arith.constant 0 : i32
    %c0_i32_0 = arith.constant 0 : i32
    %c0_i32_1 = arith.constant 0 : i32
    return %c0_i32, %c0_i32_0 : i32, i32
  }
  func.func @transform_5(%arg0: i32) -> (i32, i32) {
    %c0_i32 = arith.constant 0 : i32
    %c0_i32_0 = arith.constant 0 : i32
    %c0_i32_1 = arith.constant 0 : i32
    return %c0_i32, %c0_i32_0 : i32, i32
  }
  func.func @transform_6(%arg0: i32) -> (i32, i32) {
    %c0_i32 = arith.constant 0 : i32
    %c0_i32_0 = arith.constant 0 : i32
    %c0_i32_1 = arith.constant 0 : i32
    return %c0_i32, %c0_i32_0 : i32, i32
  }
  func.func @transform_7(%arg0: i32) -> (i32, i32) {
    %c0_i32 = arith.constant 0 : i32
    %c0_i32_0 = arith.constant 0 : i32
    return %arg0, %c0_i32 : i32, i32
  }
}

</mosaic_0001>

<llo_original>
// kernel: tpu_custom_call.1
$region0: #{tpu_custom_call.1}
  #allocation0 [shape = 'u32[]', space=smem, size = 0x4, offset = 0x4, fixed_abs, tag = 'smem constant byte address 0x4 - core index']
  #allocation1 [shape = 'u32[144,128]{1,0:T(1,128)}', space=vmem, size = 0x12000, scoped, tag = 'internal scratch']
  %s0 = inlined_call_operand.hbm [shape: bf16[32,32], index: 0, kind: input, shape index: {}]
  %s1 = inlined_call_operand.hbm [shape: bf16[32,128], index: 1, kind: input, shape index: {}]
  %s2 = inlined_call_operand.vmem [shape: f32[1,128], index: 2, kind: input, shape index: {}]
  %s3 = inlined_call_operand.hbm [shape: bf16[128,128], index: 3, kind: input, shape index: {}]
  %s4 = inlined_call_operand.vmem [shape: f32[1,128], index: 4, kind: input, shape index: {}]
  %s5 = inlined_call_operand.hbm [shape: bf16[128,128], index: 5, kind: input, shape index: {}]
  %s6 = inlined_call_operand.vmem [shape: f32[1,128], index: 6, kind: input, shape index: {}]
  %s7 = inlined_call_operand.hbm [shape: f32[32,128], index: 7, kind: output, shape index: {}]
  %s8 = sld [smem:[#allocation0]]
  $region77: #{tpu_custom_call.1} parent=0
    _
  %s10 = ssub.s32 1, %s8
  %s11 = scalar_select 0, %s10, %s8
  $region1: #{tpu_custom_call.1} parent=0
    #allocation2 [shape = 'u8[8192]{0}', space=vmem, size = 0x2000, scoped, tag = 'input window, operand 0']
    #allocation3 [shape = 's32[2]{0}', space=sflag, size = 0x8, scoped, tag = 'scoped memory for tpu_custom_call.1']
    #allocation4 [shape = 's32[2]{0}', space=sflag, size = 0x8, scoped, tag = 'scoped memory for tpu_custom_call.1']
    #allocation5 [shape = 'u8[8192]{0}', space=vmem, size = 0x2000, scoped, tag = 'input window, operand 1, single buffered']
    #allocation6 [shape = 's32[1]{0}', space=sflag, size = 0x4, scoped, tag = 'scoped memory for tpu_custom_call.1']
    #allocation7 [shape = 'u8[32768]{0}', space=vmem, size = 0x8000, scoped, tag = 'input window, operand 3, single buffered']
    #allocation8 [shape = 'u8[32768]{0}', space=vmem, size = 0x8000, scoped, tag = 'input window, operand 5, single buffered']
    #allocation9 [shape = 's32[1]{0}', space=sflag, size = 0x4, scoped, tag = 'scoped memory for tpu_custom_call.1']
    #allocation10 [shape = 'u8[16384]{0}', space=vmem, size = 0x4000, scoped, tag = 'output window, operand 0']
    %12 = vsyncpa [#allocation3], 0
    %s13 = scalar_lea.sflag [#allocation3], 1
    %14 = vsyncpa %s13, 0
    %15 = vsyncpa [#allocation6], 0
    %16 = vsyncpa [#allocation9], 0
    %17 = vsyncpa [#allocation4], 0
    %s18 = scalar_lea.sflag [#allocation4], 1
    %19 = vsyncpa %s18, 0
    loop: start=0, step=1, limit=4
    $region2: #{tpu_custom_call.1} parent=1 // loop_pre_header
      _
    $region3: #{tpu_custom_call.1} parent=1 // loop_header
      %s21 = sphi 0, %s25
      %p22 = scmp.ge.s32.totalorder %s21, 4
      %s31 = sphi 0, %s33
      %s34 = sphi 0, %s31
      %s35 = sphi 0, %s34
      %s51 = sphi 0, %s35
      %s55 = sphi 0, %s55
      %s57 = sphi 0, %s55
      %s58 = sphi 0, %s57
      %s72 = sphi 0, %s58
      %s76 = sphi 0, %s76
      %s78 = sphi 0, %s76
      %s79 = sphi 0, %s78
      %s93 = sphi 0, %s79
      %s97 = sphi 0, %s97
      %s99 = sphi 0, %s97
      %s100 = sphi 0, %s99
      %s114 = sphi 0, %s100
      %s118 = sphi 0, %s118
      %s120 = sphi 0, %s118
      %s121 = sphi 0, %s120
      %s135 = sphi 0, %s121
      %s139 = sphi 0, %s139
      %s141 = sphi 0, %s139
      %s142 = sphi 0, %s141
      %s156 = sphi 0, %s142
      %s160 = sphi 0, %s160
      %s162 = sphi 0, %s160
      %s163 = sphi 0, %s162
      %s177 = sphi 0, %s163
      %s183 = sphi 0, %s185
      %s186 = sphi 0, %s183
      %s187 = sphi 0, %s186
      %s203 = sphi 0, %s187
    $region4: #{tpu_custom_call.1} parent=1 // loop_header_branch
      %24 = sbr.rel (%p22) target = $region8
    $region5: #{tpu_custom_call.1} parent=1 // loop_body
      %s26 = ssub.s32 %s21, 1
      %s27 = ssub.s32 %s21, 2
      %s28 = sadd.s32 %s21, 1
      %s29 = ssub.s32 %s21, %s28
      %p30 = scmp.eq.s32.totalorder %s29, 0
      %s32 = sadd.s32 %s31, 1
      %s33 = scalar_select %p30, %s31, %s32
      %p36 = pneg %p30
      %p37 = scmp.eq.s32.totalorder %s21, 1
      %p38 = por %p36, %p37
      %p39 = scmp.ne.s32.totalorder %s31, %s34
      %p40 = scmp.eq.s32.totalorder %s21, 0
      %p41 = por %p39, %p40
      %p42 = scmp.ne.s32.totalorder %s31, %s34
      %p43 = scmp.eq.s32.totalorder %s26, 1
      %p44 = por %p42, %p43
      %p45 = scmp.ne.s32.totalorder %s34, %s35
      %p46 = scmp.eq.s32.totalorder %s26, 0
      %p47 = por %p45, %p46
      %p48 = scmp.ne.s32.totalorder %s34, %s35
      %p49 = scmp.eq.s32.totalorder %s27, 1
      %p50 = por %p48, %p49
      %p52 = scmp.ne.s32.totalorder %s35, %s51
      %p53 = scmp.eq.s32.totalorder %s27, 0
      %p54 = por %p52, %p53
      %s56 = sadd.s32 %s55, 1
      %p59 = scmp.eq.s32.totalorder %s21, 1
      %p60 = scmp.ne.s32.totalorder %s55, %s57
      %p61 = scmp.eq.s32.totalorder %s21, 0
      %p62 = por %p60, %p61
      %p63 = scmp.ne.s32.totalorder %s55, %s57
      %p64 = scmp.eq.s32.totalorder %s26, 1
      %p65 = por %p63, %p64
      %p66 = scmp.ne.s32.totalorder %s57, %s58
      %p67 = scmp.eq.s32.totalorder %s26, 0
      %p68 = por %p66, %p67
      %p69 = scmp.ne.s32.totalorder %s57, %s58
      %p70 = scmp.eq.s32.totalorder %s27, 1
      %p71 = por %p69, %p70
      %p73 = scmp.ne.s32.totalorder %s58, %s72
      %p74 = scmp.eq.s32.totalorder %s27, 0
      %p75 = por %p73, %p74
      %s77 = sadd.s32 %s76, 1
      %p80 = scmp.eq.s32.totalorder %s21, 1
      %p81 = scmp.ne.s32.totalorder %s76, %s78
      %p82 = scmp.eq.s32.totalorder %s21, 0
      %p83 = por %p81, %p82
      %p84 = scmp.ne.s32.totalorder %s76, %s78
      %p85 = scmp.eq.s32.totalorder %s26, 1
      %p86 = por %p84, %p85
      %p87 = scmp.ne.s32.totalorder %s78, %s79
      %p88 = scmp.eq.s32.totalorder %s26, 0
      %p89 = por %p87, %p88
      %p90 = scmp.ne.s32.totalorder %s78, %s79
      %p91 = scmp.eq.s32.totalorder %s27, 1
      %p92 = por %p90, %p91
      %p94 = scmp.ne.s32.totalorder %s79, %s93
      %p95 = scmp.eq.s32.totalorder %s27, 0
      %p96 = por %p94, %p95
      %s98 = sadd.s32 %s97, 1
      %p101 = scmp.eq.s32.totalorder %s21, 1
      %p102 = scmp.ne.s32.totalorder %s97, %s99
      %p103 = scmp.eq.s32.totalorder %s21, 0
      %p104 = por %p102, %p103
      %p105 = scmp.ne.s32.totalorder %s97, %s99
      %p106 = scmp.eq.s32.totalorder %s26, 1
      %p107 = por %p105, %p106
      %p108 = scmp.ne.s32.totalorder %s99, %s100
      %p109 = scmp.eq.s32.totalorder %s26, 0
      %p110 = por %p108, %p109
      %p111 = scmp.ne.s32.totalorder %s99, %s100
      %p112 = scmp.eq.s32.totalorder %s27, 1
      %p113 = por %p111, %p112
      %p115 = scmp.ne.s32.totalorder %s100, %s114
      %p116 = scmp.eq.s32.totalorder %s27, 0
      %p117 = por %p115, %p116
      %s119 = sadd.s32 %s118, 1
      %p122 = scmp.eq.s32.totalorder %s21, 1
      %p123 = scmp.ne.s32.totalorder %s118, %s120
      %p124 = scmp.eq.s32.totalorder %s21, 0
      %p125 = por %p123, %p124
      %p126 = scmp.ne.s32.totalorder %s118, %s120
      %p127 = scmp.eq.s32.totalorder %s26, 1
      %p128 = por %p126, %p127
      %p129 = scmp.ne.s32.totalorder %s120, %s121
      %p130 = scmp.eq.s32.totalorder %s26, 0
      %p131 = por %p129, %p130
      %p132 = scmp.ne.s32.totalorder %s120, %s121
      %p133 = scmp.eq.s32.totalorder %s27, 1
      %p134 = por %p132, %p133
      %p136 = scmp.ne.s32.totalorder %s121, %s135
      %p137 = scmp.eq.s32.totalorder %s27, 0
      %p138 = por %p136, %p137
      %s140 = sadd.s32 %s139, 1
      %p143 = scmp.eq.s32.totalorder %s21, 1
      %p144 = scmp.ne.s32.totalorder %s139, %s141
      %p145 = scmp.eq.s32.totalorder %s21, 0
      %p146 = por %p144, %p145
      %p147 = scmp.ne.s32.totalorder %s139, %s141
      %p148 = scmp.eq.s32.totalorder %s26, 1
      %p149 = por %p147, %p148
      %p150 = scmp.ne.s32.totalorder %s141, %s142
      %p151 = scmp.eq.s32.totalorder %s26, 0
      %p152 = por %p150, %p151
      %p153 = scmp.ne.s32.totalorder %s141, %s142
      %p154 = scmp.eq.s32.totalorder %s27, 1
      %p155 = por %p153, %p154
      %p157 = scmp.ne.s32.totalorder %s142, %s156
      %p158 = scmp.eq.s32.totalorder %s27, 0
      %p159 = por %p157, %p158
      %s161 = sadd.s32 %s160, 1
      %p164 = scmp.eq.s32.totalorder %s21, 1
      %p165 = scmp.ne.s32.totalorder %s160, %s162
      %p166 = scmp.eq.s32.totalorder %s21, 0
      %p167 = por %p165, %p166
      %p168 = scmp.ne.s32.totalorder %s160, %s162
      %p169 = scmp.eq.s32.totalorder %s26, 1
      %p170 = por %p168, %p169
      %p171 = scmp.ne.s32.totalorder %s162, %s163
      %p172 = scmp.eq.s32.totalorder %s26, 0
      %p173 = por %p171, %p172
      %p174 = scmp.ne.s32.totalorder %s162, %s163
      %p175 = scmp.eq.s32.totalorder %s27, 1
      %p176 = por %p174, %p175
      %p178 = scmp.ne.s32.totalorder %s163, %s177
      %p179 = scmp.eq.s32.totalorder %s27, 0
      %p180 = por %p178, %p179
      %s181 = ssub.s32 %s21, %s28
      %p182 = scmp.eq.s32.totalorder %s181, 0
      %s184 = sadd.s32 %s183, 1
      %s185 = scalar_select %p182, %s183, %s184
      %p188 = pneg %p182
      %p189 = scmp.eq.s32.totalorder %s21, 1
      %p190 = por %p188, %p189
      %p191 = scmp.ne.s32.totalorder %s183, %s186
      %p192 = scmp.eq.s32.totalorder %s21, 0
      %p193 = por %p191, %p192
      %p194 = scmp.ne.s32.totalorder %s183, %s186
      %p195 = scmp.eq.s32.totalorder %s26, 1
      %p196 = por %p194, %p195
      %p197 = scmp.ne.s32.totalorder %s186, %s187
      %p198 = scmp.eq.s32.totalorder %s26, 0
      %p199 = por %p197, %p198
      %p200 = scmp.ne.s32.totalorder %s186, %s187
      %p201 = scmp.eq.s32.totalorder %s27, 1
      %p202 = por %p200, %p201
      %p204 = scmp.ne.s32.totalorder %s187, %s203
      %p205 = scmp.eq.s32.totalorder %s27, 0
      %p206 = por %p204, %p205
      %p207 = scmp.le.s32.totalorder 1, %s21
      %p208 = scmp.lt.s32.totalorder %s21, 3
      %p209 = pnand %p207, %p208
      %p210 = pneg %p209
      // Predicated region
      $region9: #{tpu_custom_call.1} parent=5 // pred_check
        _
      $region10: #{tpu_custom_call.1} parent=5 // pred_check_branch
        %212 = sbr.rel (%p209) target = $region12
      $region11: #{tpu_custom_call.1} parent=5 // pred_region
        %s213 = ssub.s32 %s21, 1
        // Predicated region
        $region13: #{tpu_custom_call.1} parent=11 // pred_check
          %p214 = pneg %p68
        $region14: #{tpu_custom_call.1} parent=11 // pred_check_branch
          %216 = sbr.rel (%p214) target = $region16
        $region15: #{tpu_custom_call.1} parent=11 // pred_region
          %s218 = ssub.s32 256, 256
          %219 = vsyncadd [#allocation6], %s218
          %s220 = sshll.u32 [#allocation5], 4
          %s221 = int_to_ptr.vmem [resolvable:$true] %s220
          %226 = dma.hbm_to_vmem [thread:$0]  %s1, 256, %s221, [#allocation6], 64, 64, 4
        $region16: #{tpu_custom_call.1} parent=11 // pred_fallthru
          _
        // Predicated region
        $region17: #{tpu_custom_call.1} parent=11 // pred_check
          %p227 = pneg %p89
        $region18: #{tpu_custom_call.1} parent=11 // pred_check_branch
          %229 = sbr.rel (%p227) target = $region20
        $region19: #{tpu_custom_call.1} parent=11 // pred_region
          _
        $region20: #{tpu_custom_call.1} parent=11 // pred_fallthru
          _
        // Predicated region
        $region21: #{tpu_custom_call.1} parent=11 // pred_check
          %p230 = pneg %p110
        $region22: #{tpu_custom_call.1} parent=11 // pred_check_branch
          %232 = sbr.rel (%p230) target = $region24
        $region23: #{tpu_custom_call.1} parent=11 // pred_region
          %s234 = ssub.s32 1024, 1024
          %235 = vsyncadd [#allocation6], %s234
          %s236 = sshll.u32 [#allocation7], 4
          %s237 = int_to_ptr.vmem [resolvable:$true] %s236
          %242 = dma.hbm_to_vmem [thread:$0]  %s3, 1024, %s237, [#allocation6], 64, 64, 4
        $region24: #{tpu_custom_call.1} parent=11 // pred_fallthru
          _
        // Predicated region
        $region25: #{tpu_custom_call.1} parent=11 // pred_check
          %p243 = pneg %p131
        $region26: #{tpu_custom_call.1} parent=11 // pred_check_branch
          %245 = sbr.rel (%p243) target = $region28
        $region27: #{tpu_custom_call.1} parent=11 // pred_region
          _
        $region28: #{tpu_custom_call.1} parent=11 // pred_fallthru
          _
        // Predicated region
        $region29: #{tpu_custom_call.1} parent=11 // pred_check
          %p246 = pneg %p152
        $region30: #{tpu_custom_call.1} parent=11 // pred_check_branch
          %248 = sbr.rel (%p246) target = $region32
        $region31: #{tpu_custom_call.1} parent=11 // pred_region
          %s250 = ssub.s32 1024, 1024
          %251 = vsyncadd [#allocation9], %s250
          %s252 = sshll.u32 [#allocation8], 4
          %s253 = int_to_ptr.vmem [resolvable:$true] %s252
          %258 = dma.hbm_to_vmem [thread:$0]  %s5, 1024, %s253, [#allocation9], 64, 64, 4
        $region32: #{tpu_custom_call.1} parent=11 // pred_fallthru
          _
        // Predicated region
        $region33: #{tpu_custom_call.1} parent=11 // pred_check
          %p259 = pneg %p173
        $region34: #{tpu_custom_call.1} parent=11 // pred_check_branch
          %261 = sbr.rel (%p259) target = $region36
        $region35: #{tpu_custom_call.1} parent=11 // pred_region
          _
        $region36: #{tpu_custom_call.1} parent=11 // pred_fallthru
          _
      $region12: #{tpu_custom_call.1} parent=5 // pred_fallthru
        _
      %p262 = scmp.lt.s32.totalorder %s21, 2
      // Predicated region
      $region37: #{tpu_custom_call.1} parent=5 // pred_check
        %p263 = pneg %p262
      $region38: #{tpu_custom_call.1} parent=5 // pred_check_branch
        %265 = sbr.rel (%p263) target = $region40
      $region39: #{tpu_custom_call.1} parent=5 // pred_region
        // Predicated region
        $region41: #{tpu_custom_call.1} parent=39 // pred_check
          %p266 = pneg %p41
        $region42: #{tpu_custom_call.1} parent=39 // pred_check_branch
          %268 = sbr.rel (%p266) target = $region44
        $region43: #{tpu_custom_call.1} parent=39 // pred_region
          %s269 = sand.u32 %s31, 1
          %s270 = scalar_lea.sflag [#allocation3], %s269
          %s271 = sand.u32 %s31, 1
          %s272 = smul.addr %s271, 8
          %s273 = scalar_lea.vmem [#allocation2], %s272
          %s274 = smul.u32 2, %s21
          %s276 = ssub.s32 128, 128
          %277 = vsyncadd %s270, %s276
          %s278 = smul.addr %s274, 64
          %s279 = scalar_lea.hbm %s0, %s278
          %s280 = sshll.u32 %s273, 4
          %s281 = int_to_ptr.vmem [resolvable:$true] %s280
          %286 = dma.hbm_to_vmem [thread:$0]  %s279, 128, %s281, %s270, 64, 64, 4
        $region44: #{tpu_custom_call.1} parent=39 // pred_fallthru
          _
      $region40: #{tpu_custom_call.1} parent=5 // pred_fallthru
        _
      %p287 = scmp.le.s32.totalorder 1, %s21
      %p288 = scmp.lt.s32.totalorder %s21, 3
      %p289 = pnand %p287, %p288
      %p290 = pneg %p289
      // Predicated region
      $region45: #{tpu_custom_call.1} parent=5 // pred_check
        _
      $region46: #{tpu_custom_call.1} parent=5 // pred_check_branch
        %292 = sbr.rel (%p289) target = $region48
      $region47: #{tpu_custom_call.1} parent=5 // pred_region
        %s293 = ssub.s32 %s21, 1
        %s294 = sand.u32 %s34, 1
        %s295 = scalar_lea.sflag [#allocation3], %s294
        %s296 = sand.u32 %s34, 1
        %s297 = smul.addr %s296, 8
        %s298 = scalar_lea.vmem [#allocation2], %s297
        // Predicated region
        $region49: #{tpu_custom_call.1} parent=47 // pred_check
          %p299 = pneg %p47
        $region50: #{tpu_custom_call.1} parent=47 // pred_check_branch
          %301 = sbr.rel (%p299) target = $region52
        $region51: #{tpu_custom_call.1} parent=47 // pred_region
          %302 = dma.done %s295, 128
        $region52: #{tpu_custom_call.1} parent=47 // pred_fallthru
          _
        // Predicated region
        $region53: #{tpu_custom_call.1} parent=47 // pred_check
          %p303 = pneg %p68
        $region54: #{tpu_custom_call.1} parent=47 // pred_check_branch
          %305 = sbr.rel (%p303) target = $region56
        $region55: #{tpu_custom_call.1} parent=47 // pred_region
          %306 = dma.done [#allocation6], 256
        $region56: #{tpu_custom_call.1} parent=47 // pred_fallthru
          _
        // Predicated region
        $region57: #{tpu_custom_call.1} parent=47 // pred_check
          %p307 = pneg %p110
        $region58: #{tpu_custom_call.1} parent=47 // pred_check_branch
          %309 = sbr.rel (%p307) target = $region60
        $region59: #{tpu_custom_call.1} parent=47 // pred_region
          %310 = dma.done [#allocation6], 1024
        $region60: #{tpu_custom_call.1} parent=47 // pred_fallthru
          _
        // Predicated region
        $region61: #{tpu_custom_call.1} parent=47 // pred_check
          %p311 = pneg %p152
        $region62: #{tpu_custom_call.1} parent=47 // pred_check_branch
          %313 = sbr.rel (%p311) target = $region64
        $region63: #{tpu_custom_call.1} parent=47 // pred_region
          %314 = dma.done [#allocation9], 1024
        $region64: #{tpu_custom_call.1} parent=47 // pred_fallthru
          _
        %s315 = sand.u32 %s34, 1
        %s316 = scalar_lea.sflag [#allocation3], %s315
        %s317 = sand.u32 %s34, 1
        %s318 = smul.addr %s317, 8
        %s319 = scalar_lea.vmem [#allocation2], %s318
        %p320 = pneg %p47
        %p321 = pneg %p44
        %p322 = pneg %p68
        %p323 = pneg %p65
        %p324 = pneg %p89
        %p325 = pneg %p86
        %p326 = pneg %p110
        %p327 = pneg %p107
        %p328 = pneg %p131
        %p329 = pneg %p128
        %p330 = pneg %p152
        %p331 = pneg %p149
        %p332 = pneg %p173
        %p333 = pneg %p170
        %p334 = pneg %p199
        %p335 = pneg %p196
        %s336 = sand.u32 %s186, 1
        %s337 = scalar_lea.sflag [#allocation4], %s336
        %s338 = sand.u32 %s186, 1
        %s339 = smul.addr %s338, 16
        %s340 = scalar_lea.vmem [#allocation10], %s339
        %s341 = smul.u32 2, %s26
        %s342 = smul.u32 2, %s26
        %v344 = vld [vmem:[%s298] sm:$0xf]
        %v345 = vld [vmem:[%s298 + $0x4] sm:$0xf]
        %v346 = vld [vmem:[#allocation5] sm:$0xf]
        %v347 = vld [vmem:[#allocation5 + $0x4] sm:$0xf]
        %v348 = vld [vmem:[#allocation5 + $0x8] sm:$0xf]
        %v349 = vld [vmem:[#allocation5 + $0xc] sm:$0xf]
        %v350 = vld [vmem:[%s2] sm:$0x1]
        %v352 = vlaneseq
        %v353 = vshrl.u32 %v352, 7
        %v354 = vsub.s32 0, %v353
        %v355 = vrot.slane %v350, %v354
        %v359 = vunpack.c.l.b16 %v344
        %v360 = vunpack.c.l.b16 %v345
        %v361 = vpack.c.b16 %v360, %v359
        %v366 = vunpack.c.l.b16 %v346
        %v367 = vunpack.c.l.b16 %v347
        %v368 = vunpack.c.l.b16 %v348
        %v369 = vunpack.c.l.b16 %v349
        %v370 = vpack.c.b16 %v367, %v366
        %v371 = vpack.c.b16 %v369, %v368
        %vm374 = vcmask 261120
        %v376 = vsel %vm374, %v361, 0
        %378 = vmatprep.subr.bf16.mxu0 0
        %379 = vmatpush1.bf16.msra.mxu0 0
        %380 = vmatprep.subr.bf16.mxu0 0
        %381 = vmatpush1.bf16.msra.mxu0 0
        %382 = vmatprep.subr.bf16.mxu0 0
        %383 = vmatpush1.bf16.msra.mxu0 0
        %384 = vmatprep.subr.bf16.mxu0 0
        %385 = vmatpush1.bf16.msra.mxu0 0
        %386 = vmatprep.subr.bf16.mxu0 0
        %387 = vmatpush1.bf16.msra.mxu0 0
        %388 = vmatprep.subr.bf16.mxu0 0
        %389 = vmatpush1.bf16.msra.mxu0 0
        %390 = vmatprep.subr.bf16.mxu0 0
        %391 = vmatpush1.bf16.msra.mxu0 %v371
        %392 = vmatprep.subr.bf16.mxu0 0
        %393 = vmatpush1.bf16.msra.mxu0 %v370
        %394 = vmatprep.subr.bf16.mxu0 0
        %395 = vmatpush2.bf16.msra.mxu0 0
        %396 = vmatprep.subr.bf16.mxu0 0
        %397 = vmatpush2.bf16.msra.mxu0 0
        %398 = vmatprep.subr.bf16.mxu0 0
        %399 = vmatpush2.bf16.msra.mxu0 0
        %400 = vmatprep.subr.bf16.mxu0 0
        %401 = vmatpush2.bf16.msra.mxu0 0
        %402 = vmatprep.subr.bf16.mxu0 0
        %403 = vmatpush2.bf16.msra.mxu0 0
        %404 = vmatprep.subr.bf16.mxu0 0
        %405 = vmatpush2.bf16.msra.mxu0 0
        %406 = vmatprep.subr.bf16.mxu0 0
        %407 = vmatpush2.bf16.msra.mxu0 0
        %408 = vmatprep.subr.bf16.mxu0 0
        %409 = vmatpush2.bf16.msra.mxu0 0
        %410 = vmatprep.mubr.bf16.mxu0 0
        %411 = vmatmul.mubr.bf16.gmra.mxu0 %v376
        %v412 = vpop.f32.mrf.mxu0
        %v413 = vadd.f32 %v355, %v412
        %v414 = vpop.f32.mrf.mxu0
        %v415 = vpop.f32.mrf.mxu0
        %v416 = vadd.f32 %v355, %v415
        %v417 = vpop.f32.mrf.mxu0
        %418 = vdwg.mxu0
        %v419 = vmul.f32 %v413, 0.5
        %v420 = vmul.f32 %v416, 0.5
        %v421 = vmul.f32 %v413, 0.70710677
        %v422 = vmul.f32 %v416, 0.70710677
        %v423 = vand.u32 2147483647, %v421
        %v424 = vand.u32 2147483647, %v422
        %v425 = vmul.f32 %v423, 0.3275911
        %v426 = vmul.f32 %v424, 0.3275911
        %v427 = vadd.f32 %v425, 1.0
        %v428 = vadd.f32 %v426, 1.0
        %v429 = vrcp.pop %v427
        %v430 = vrcp.pop %v428
        %v431 = vmul.f32 %v429, 1.0614054
        %v432 = vmul.f32 %v430, 1.0614054
        %v433 = vadd.f32 %v431, -1.4531521
        %v434 = vadd.f32 %v432, -1.4531521
        %v435 = vmul.f32 %v429, %v433
        %v436 = vmul.f32 %v430, %v434
        %v437 = vadd.f32 %v435, 1.4214138
        %v438 = vadd.f32 %v436, 1.4214138
        %v439 = vmul.f32 %v429, %v437
        %v440 = vmul.f32 %v430, %v438
        %v441 = vadd.f32 %v439, -0.28449672
        %v442 = vadd.f32 %v440, -0.28449672
        %v443 = vmul.f32 %v429, %v441
        %v444 = vmul.f32 %v430, %v442
        %v445 = vadd.f32 %v443, 0.2548296
        %v446 = vadd.f32 %v444, 0.2548296
        %v447 = vmul.f32 %v429, %v445
        %v448 = vmul.f32 %v430, %v446
        %v449 = vsub.f32 0.0, %v423
        %v450 = vsub.f32 0.0, %v424
        %v451 = vmul.f32 %v449, %v423
        %v452 = vmul.f32 %v450, %v424
        %v453 = vmul.f32 %v451, 1.442695
        %v454 = vpow.pop %v453
        %v455 = vmul.f32 %v452, 1.442695
        %v456 = vpow.pop %v455
        %v457 = vmul.f32 %v447, %v454
        %v458 = vmul.f32 %v448, %v456
        %v459 = vsub.f32 1.0, %v457
        %v460 = vsub.f32 1.0, %v458
        %vm461 = vcmp.lt.f32.partialorder %v421, 0.0
        %vm462 = vcmp.lt.f32.partialorder %v422, 0.0
        %v463 = vsub.f32 0.0, %v459
        %v464 = vsub.f32 0.0, %v460
        %v465 = vsel %vm461, %v463, %v459
        %v466 = vsel %vm462, %v464, %v460
        %v467 = vadd.f32 %v465, 1.0
        %v468 = vadd.f32 %v466, 1.0
        %v469 = vmul.f32 %v419, %v467
        %v470 = vmul.f32 %v420, %v468
        %v471 = vpack.c.bf16 %v470, %v469
        %v472 = vld [vmem:[#allocation7] sm:$0xf]
        %v473 = vld [vmem:[#allocation7 + $0x4] sm:$0xf]
        %v474 = vld [vmem:[#allocation7 + $0x8] sm:$0xf]
        %v475 = vld [vmem:[#allocation7 + $0xc] sm:$0xf]
        %v476 = vld [vmem:[#allocation7 + $0x10] sm:$0xf]
        %v477 = vld [vmem:[#allocation7 + $0x14] sm:$0xf]
        %v478 = vld [vmem:[#allocation7 + $0x18] sm:$0xf]
        %v479 = vld [vmem:[#allocation7 + $0x1c] sm:$0xf]
        %v480 = vld [vmem:[#allocation7 + $0x20] sm:$0xf]
        %v481 = vld [vmem:[#allocation7 + $0x24] sm:$0xf]
        %v482 = vld [vmem:[#allocation7 + $0x28] sm:$0xf]
        %v483 = vld [vmem:[#allocation7 + $0x2c] sm:$0xf]
        %v484 = vld [vmem:[#allocation7 + $0x30] sm:$0xf]
        %v485 = vld [vmem:[#allocation7 + $0x34] sm:$0xf]
        %v486 = vld [vmem:[#allocation7 + $0x38] sm:$0xf]
        %v487 = vld [vmem:[#allocation7 + $0x3c] sm:$0xf]
        %v488 = vld [vmem:[%s4] sm:$0x1]
        %v490 = vlaneseq
        %v491 = vshrl.u32 %v490, 7
        %v492 = vsub.s32 0, %v491
        %v493 = vrot.slane %v488, %v492
        %v511 = vunpack.c.l.b16 %v472
        %v512 = vunpack.c.l.b16 %v473
        %v513 = vunpack.c.l.b16 %v474
        %v514 = vunpack.c.l.b16 %v475
        %v515 = vunpack.c.l.b16 %v476
        %v516 = vunpack.c.l.b16 %v477
        %v517 = vunpack.c.l.b16 %v478
        %v518 = vunpack.c.l.b16 %v479
        %v519 = vunpack.c.l.b16 %v480
        %v520 = vunpack.c.l.b16 %v481
        %v521 = vunpack.c.l.b16 %v482
        %v522 = vunpack.c.l.b16 %v483
        %v523 = vunpack.c.l.b16 %v484
        %v524 = vunpack.c.l.b16 %v485
        %v525 = vunpack.c.l.b16 %v486
        %v526 = vunpack.c.l.b16 %v487
        %v527 = vpack.c.b16 %v512, %v511
        %v528 = vpack.c.b16 %v514, %v513
        %v529 = vpack.c.b16 %v516, %v515
        %v530 = vpack.c.b16 %v518, %v517
        %v531 = vpack.c.b16 %v520, %v519
        %v532 = vpack.c.b16 %v522, %v521
        %v533 = vpack.c.b16 %v524, %v523
        %v534 = vpack.c.b16 %v526, %v525
        %543 = vmatprep.subr.bf16.mxu0 0
        %544 = vmatpush1.bf16.msra.mxu0 %v534
        %545 = vmatprep.subr.bf16.mxu0 0
        %546 = vmatpush1.bf16.msra.mxu0 %v533
        %547 = vmatprep.subr.bf16.mxu0 0
        %548 = vmatpush1.bf16.msra.mxu0 %v532
        %549 = vmatprep.subr.bf16.mxu0 0
        %550 = vmatpush1.bf16.msra.mxu0 %v531
        %551 = vmatprep.subr.bf16.mxu0 0
        %552 = vmatpush1.bf16.msra.mxu0 %v530
        %553 = vmatprep.subr.bf16.mxu0 0
        %554 = vmatpush1.bf16.msra.mxu0 %v529
        %555 = vmatprep.subr.bf16.mxu0 0
        %556 = vmatpush1.bf16.msra.mxu0 %v528
        %557 = vmatprep.subr.bf16.mxu0 0
        %558 = vmatpush1.bf16.msra.mxu0 %v527
        %559 = vmatprep.subr.bf16.mxu0 0
        %560 = vmatpush2.bf16.msra.mxu0 0
        %561 = vmatprep.subr.bf16.mxu0 0
        %562 = vmatpush2.bf16.msra.mxu0 0
        %563 = vmatprep.subr.bf16.mxu0 0
        %564 = vmatpush2.bf16.msra.mxu0 0
        %565 = vmatprep.subr.bf16.mxu0 0
        %566 = vmatpush2.bf16.msra.mxu0 0
        %567 = vmatprep.subr.bf16.mxu0 0
        %568 = vmatpush2.bf16.msra.mxu0 0
        %569 = vmatprep.subr.bf16.mxu0 0
        %570 = vmatpush2.bf16.msra.mxu0 0
        %571 = vmatprep.subr.bf16.mxu0 0
        %572 = vmatpush2.bf16.msra.mxu0 0
        %573 = vmatprep.subr.bf16.mxu0 0
        %574 = vmatpush2.bf16.msra.mxu0 0
        %575 = vmatprep.mubr.bf16.mxu0 0
        %576 = vmatmul.mubr.bf16.gmra.mxu0 %v471
        %v577 = vpop.f32.mrf.mxu0
        %v578 = vadd.f32 %v493, %v577
        %v579 = vpop.f32.mrf.mxu0
        %v580 = vpop.f32.mrf.mxu0
        %v581 = vadd.f32 %v493, %v580
        %v582 = vpop.f32.mrf.mxu0
        %583 = vdwg.mxu0
        %v584 = vmul.f32 %v578, 0.5
        %v585 = vmul.f32 %v581, 0.5
        %v586 = vmul.f32 %v578, 0.70710677
        %v587 = vmul.f32 %v581, 0.70710677
        %v588 = vand.u32 2147483647, %v586
        %v589 = vand.u32 2147483647, %v587
        %v590 = vmul.f32 %v588, 0.3275911
        %v591 = vmul.f32 %v589, 0.3275911
        %v592 = vadd.f32 %v590, 1.0
        %v593 = vadd.f32 %v591, 1.0
        %v594 = vrcp.pop %v592
        %v595 = vrcp.pop %v593
        %v596 = vmul.f32 %v594, 1.0614054
        %v597 = vmul.f32 %v595, 1.0614054
        %v598 = vadd.f32 %v596, -1.4531521
        %v599 = vadd.f32 %v597, -1.4531521
        %v600 = vmul.f32 %v594, %v598
        %v601 = vmul.f32 %v595, %v599
        %v602 = vadd.f32 %v600, 1.4214138
        %v603 = vadd.f32 %v601, 1.4214138
        %v604 = vmul.f32 %v594, %v602
        %v605 = vmul.f32 %v595, %v603
        %v606 = vadd.f32 %v604, -0.28449672
        %v607 = vadd.f32 %v605, -0.28449672
        %v608 = vmul.f32 %v594, %v606
        %v609 = vmul.f32 %v595, %v607
        %v610 = vadd.f32 %v608, 0.2548296
        %v611 = vadd.f32 %v609, 0.2548296
        %v612 = vmul.f32 %v594, %v610
        %v613 = vmul.f32 %v595, %v611
        %v614 = vsub.f32 0.0, %v588
        %v615 = vsub.f32 0.0, %v589
        %v616 = vmul.f32 %v614, %v588
        %v617 = vmul.f32 %v615, %v589
        %v618 = vmul.f32 %v616, 1.442695
        %v619 = vpow.pop %v618
        %v620 = vmul.f32 %v617, 1.442695
        %v621 = vpow.pop %v620
        %v622 = vmul.f32 %v612, %v619
        %v623 = vmul.f32 %v613, %v621
        %v624 = vsub.f32 1.0, %v622
        %v625 = vsub.f32 1.0, %v623
        %vm626 = vcmp.lt.f32.partialorder %v586, 0.0
        %vm627 = vcmp.lt.f32.partialorder %v587, 0.0
        %v628 = vsub.f32 0.0, %v624
        %v629 = vsub.f32 0.0, %v625
        %v630 = vsel %vm626, %v628, %v624
        %v631 = vsel %vm627, %v629, %v625
        %v632 = vadd.f32 %v630, 1.0
        %v633 = vadd.f32 %v631, 1.0
        %v634 = vmul.f32 %v584, %v632
        %v635 = vmul.f32 %v585, %v633
        %v636 = vpack.c.bf16 %v635, %v634
        %v637 = vld [vmem:[#allocation8] sm:$0xf]
        %v638 = vld [vmem:[#allocation8 + $0x4] sm:$0xf]
        %v639 = vld [vmem:[#allocation8 + $0x8] sm:$0xf]
        %v640 = vld [vmem:[#allocation8 + $0xc] sm:$0xf]
        %v641 = vld [vmem:[#allocation8 + $0x10] sm:$0xf]
        %v642 = vld [vmem:[#allocation8 + $0x14] sm:$0xf]
        %v643 = vld [vmem:[#allocation8 + $0x18] sm:$0xf]
        %v644 = vld [vmem:[#allocation8 + $0x1c] sm:$0xf]
        %v645 = vld [vmem:[#allocation8 + $0x20] sm:$0xf]
        %v646 = vld [vmem:[#allocation8 + $0x24] sm:$0xf]
        %v647 = vld [vmem:[#allocation8 + $0x28] sm:$0xf]
        %v648 = vld [vmem:[#allocation8 + $0x2c] sm:$0xf]
        %v649 = vld [vmem:[#allocation8 + $0x30] sm:$0xf]
        %v650 = vld [vmem:[#allocation8 + $0x34] sm:$0xf]
        %v651 = vld [vmem:[#allocation8 + $0x38] sm:$0xf]
        %v652 = vld [vmem:[#allocation8 + $0x3c] sm:$0xf]
        %v653 = vld [vmem:[%s6] sm:$0x1]
        %v655 = vlaneseq
        %v656 = vshrl.u32 %v655, 7
        %v657 = vsub.s32 0, %v656
        %v658 = vrot.slane %v653, %v657
        %v676 = vunpack.c.l.b16 %v637
        %v677 = vunpack.c.l.b16 %v638
        %v678 = vunpack.c.l.b16 %v639
        %v679 = vunpack.c.l.b16 %v640
        %v680 = vunpack.c.l.b16 %v641
        %v681 = vunpack.c.l.b16 %v642
        %v682 = vunpack.c.l.b16 %v643
        %v683 = vunpack.c.l.b16 %v644
        %v684 = vunpack.c.l.b16 %v645
        %v685 = vunpack.c.l.b16 %v646
        %v686 = vunpack.c.l.b16 %v647
        %v687 = vunpack.c.l.b16 %v648
        %v688 = vunpack.c.l.b16 %v649
        %v689 = vunpack.c.l.b16 %v650
        %v690 = vunpack.c.l.b16 %v651
        %v691 = vunpack.c.l.b16 %v652
        %v692 = vpack.c.b16 %v677, %v676
        %v693 = vpack.c.b16 %v679, %v678
        %v694 = vpack.c.b16 %v681, %v680
        %v695 = vpack.c.b16 %v683, %v682
        %v696 = vpack.c.b16 %v685, %v684
        %v697 = vpack.c.b16 %v687, %v686
        %v698 = vpack.c.b16 %v689, %v688
        %v699 = vpack.c.b16 %v691, %v690
        %708 = vmatprep.subr.bf16.mxu0 0
        %709 = vmatpush1.bf16.msra.mxu0 %v699
        %710 = vmatprep.subr.bf16.mxu0 0
        %711 = vmatpush1.bf16.msra.mxu0 %v698
        %712 = vmatprep.subr.bf16.mxu0 0
        %713 = vmatpush1.bf16.msra.mxu0 %v697
        %714 = vmatprep.subr.bf16.mxu0 0
        %715 = vmatpush1.bf16.msra.mxu0 %v696
        %716 = vmatprep.subr.bf16.mxu0 0
        %717 = vmatpush1.bf16.msra.mxu0 %v695
        %718 = vmatprep.subr.bf16.mxu0 0
        %719 = vmatpush1.bf16.msra.mxu0 %v694
        %720 = vmatprep.subr.bf16.mxu0 0
        %721 = vmatpush1.bf16.msra.mxu0 %v693
        %722 = vmatprep.subr.bf16.mxu0 0
        %723 = vmatpush1.bf16.msra.mxu0 %v692
        %724 = vmatprep.subr.bf16.mxu0 0
        %725 = vmatpush2.bf16.msra.mxu0 0
        %726 = vmatprep.subr.bf16.mxu0 0
        %727 = vmatpush2.bf16.msra.mxu0 0
        %728 = vmatprep.subr.bf16.mxu0 0
        %729 = vmatpush2.bf16.msra.mxu0 0
        %730 = vmatprep.subr.bf16.mxu0 0
        %731 = vmatpush2.bf16.msra.mxu0 0
        %732 = vmatprep.subr.bf16.mxu0 0
        %733 = vmatpush2.bf16.msra.mxu0 0
        %734 = vmatprep.subr.bf16.mxu0 0
        %735 = vmatpush2.bf16.msra.mxu0 0
        %736 = vmatprep.subr.bf16.mxu0 0
        %737 = vmatpush2.bf16.msra.mxu0 0
        %738 = vmatprep.subr.bf16.mxu0 0
        %739 = vmatpush2.bf16.msra.mxu0 0
        %740 = vmatprep.mubr.bf16.mxu0 0
        %741 = vmatmul.mubr.bf16.gmra.mxu0 %v636
        %v742 = vpop.f32.mrf.mxu0
        %v743 = vadd.f32 %v658, %v742
        %v744 = vpop.f32.mrf.mxu0
        %v745 = vpop.f32.mrf.mxu0
        %v746 = vadd.f32 %v658, %v745
        %v747 = vpop.f32.mrf.mxu0
        %748 = vdwg.mxu0
        %749 = vst [vmem:[%s340] sm:$0xff] %v743
        %750 = vst [vmem:[%s340 + $0x8] sm:$0xff] %v746
        %s751 = sand.u32 %s186, 1
        %s752 = scalar_lea.sflag [#allocation4], %s751
        %s753 = sand.u32 %s186, 1
        %s754 = smul.addr %s753, 16
        %s755 = scalar_lea.vmem [#allocation10], %s754
        // Predicated region
        $region65: #{tpu_custom_call.1} parent=47 // pred_check
          %p756 = pneg %p196
        $region66: #{tpu_custom_call.1} parent=47 // pred_check_branch
          %758 = sbr.rel (%p756) target = $region68
        $region67: #{tpu_custom_call.1} parent=47 // pred_region
          %s759 = smul.u32 2, %s26
          %s761 = ssub.s32 256, 256
          %762 = vsyncadd %s752, %s761
          %s763 = smul.addr %s759, 128
          %s764 = scalar_lea.hbm %s7, %s763
          %s765 = sshll.u32 %s755, 4
          %s766 = int_to_ptr.vmem [resolvable:$true] %s765
          %771 = dma.vmem_to_hbm [thread:$0]  %s766, 256, %s764, %s752, 128, 128, 8
        $region68: #{tpu_custom_call.1} parent=47 // pred_fallthru
          _
      $region48: #{tpu_custom_call.1} parent=5 // pred_fallthru
        _
      %p772 = scmp.le.s32.totalorder 2, %s21
      // Predicated region
      $region69: #{tpu_custom_call.1} parent=5 // pred_check
        %p773 = pneg %p772
      $region70: #{tpu_custom_call.1} parent=5 // pred_check_branch
        %775 = sbr.rel (%p773) target = $region72
      $region71: #{tpu_custom_call.1} parent=5 // pred_region
        %s776 = ssub.s32 %s21, 2
        // Predicated region
        $region73: #{tpu_custom_call.1} parent=71 // pred_check
          %p777 = pneg %p202
        $region74: #{tpu_custom_call.1} parent=71 // pred_check_branch
          %779 = sbr.rel (%p777) target = $region76
        $region75: #{tpu_custom_call.1} parent=71 // pred_region
          %s780 = sand.u32 %s187, 1
          %s781 = scalar_lea.sflag [#allocation4], %s780
          %s782 = sand.u32 %s187, 1
          %s783 = smul.addr %s782, 16
          %s784 = scalar_lea.vmem [#allocation10], %s783
          %785 = dma.done %s781, 256
        $region76: #{tpu_custom_call.1} parent=71 // pred_fallthru
          _
      $region72: #{tpu_custom_call.1} parent=5 // pred_fallthru
        _
    $region6: #{tpu_custom_call.1} parent=1 // loop_footer
      %s25 = sadd.s32 1, %s21
    $region7: #{tpu_custom_call.1} parent=1 // loop_footer_branch
      %20 = sbr.rel target = $region3
    $region8: #{tpu_custom_call.1} parent=1 // loop_exit
      _
    %786 = vsyncpa [#allocation3], 1
    %s787 = scalar_lea.sflag [#allocation3], 1
    %788 = vsyncpa %s787, 1
    %789 = vsyncpa [#allocation6], 1
    %790 = vsyncpa [#allocation9], 1
    %791 = vsyncpa [#allocation4], 1
    %s792 = scalar_lea.sflag [#allocation4], 1
    %793 = vsyncpa %s792, 1

</llo_original>
